<compile_context>
chip_gen: v6e
topology: v6e:2x2x1
jax: 0.10.0
libtpu: 0.0.40
codegen_flags: <defaults>
</compile_context>

<pallas_src>
import jax
import jax.numpy as jnp
from jax import lax
from jax.experimental import pallas as pl
from jax.experimental.pallas import tpu as pltpu


def _cdiv(a, b):
    return -(-a // b)


def _make_kernel(tile_rows, d):
    def kernel(t_ref, len_ref, x_ref, cond_ref, w_ref, b_ref, out_ref, acc_ref):
        b = pl.program_id(0)   # batch (parallel)
        i = pl.program_id(1)   # sequence tile (reduction)

        @pl.when(i == 0)
        def _init():
            acc_ref[...] = jnp.zeros_like(acc_ref)

        t = t_ref[0]
        length = len_ref[b]

        # Absolute sequence positions covered by this tile (within batch b).
        n_idx = i * tile_rows + lax.broadcasted_iota(jnp.int32, (tile_rows, 1), 0)
        keep = n_idx < t                                        # input keep mask
        lm = jnp.logical_and(n_idx >= t, n_idx < length)        # loss mask (also
        #                                                         kills ragged rows)

        xb = x_ref[0]                                           # (T, D) bf16
        cb = cond_ref[0]                                        # (T, D) bf16

        # masked = x * seq_mask[..., None] + cond   (bf16 elementwise, gated with
        # where so garbage rows can't inject NaN/Inf via 0*NaN)
        zero = jnp.array(0, dtype=xb.dtype)
        masked = jnp.where(keep, xb, zero) + cb

        # backbone stand-in: single linear layer, bf16 MXU with f32 accumulation
        out = jnp.dot(masked, w_ref[...], preferred_element_type=jnp.float32)
        out = out + b_ref[...]

        diff = out - xb.astype(jnp.float32)
        sq = jnp.where(lm, diff * diff, 0.0)
        ab = jnp.where(lm, jnp.abs(diff), 0.0)

        # (8, D) partial accumulators: cheap vreg adds, no per-step sublane reduce,
        # no masked sub-8-sublane stores.
        if tile_rows % 8 == 0:
            acc_ref[0:8, :] += jnp.sum(sq.reshape(-1, 8, d), axis=0)
            acc_ref[8:16, :] += jnp.sum(ab.reshape(-1, 8, d), axis=0)
        else:
            acc_ref[0:1, :] += jnp.sum(sq, axis=0, keepdims=True)
            acc_ref[8:9, :] += jnp.sum(ab, axis=0, keepdims=True)

        @pl.when(i == pl.num_programs(1) - 1)
        def _finalize():
            out_ref[...] = acc_ref[...].reshape(out_ref.shape)

    return kernel


def regression_loss(x, cond, lengths, w, b, t, *, tile_rows=None,
                    storage_dtype=jnp.bfloat16):
    """x, cond: (B, N, D); lengths: (B,) ints (valid prefix lengths);
    w: (D, D); b: (D,); t: int (static or traced)."""
    B, N, D = x.shape

    len_arr = jnp.minimum(jnp.asarray(lengths, dtype=jnp.int32), N)
    t_arr = jnp.asarray(t, dtype=jnp.int32).reshape((1,))

    # --- loss denominator (matches torch mse/l1 default reduction='mean') ---
    count = jnp.sum(jnp.maximum(len_arr - t_arr[0], 0)).astype(jnp.float32) * jnp.float32(D)
    denom = jnp.maximum(count, jnp.float32(1.0))     # guard empty selection

    # --- bf16 storage of the heavy streams (kernel accumulates in f32) ---
    x_s = x if x.dtype == storage_dtype else x.astype(storage_dtype)
    cond_s = cond if cond.dtype == storage_dtype else cond.astype(storage_dtype)
    w_s = w if w.dtype == storage_dtype else w.astype(storage_dtype)
    b2 = b.reshape(1, D).astype(jnp.float32)

    itemsize = int(jnp.dtype(storage_dtype).itemsize)

    # --- sequence tiling: largest tile under ~16 MiB for the two double-buffered
    #     x/cond streams, multiple of 8 rows (or full N) ---
    if tile_rows is None:
        budget = 16 * 1024 * 1024
        tile_rows = budget // max(1, 4 * D * itemsize)
        tile_rows = int(max(8, min(2048, tile_rows)))
    if tile_rows >= N:
        tile_rows = N                       # single full-extent block per batch
    else:
        tile_rows = max(8, (tile_rows // 8) * 8)
    inner = _cdiv(N, tile_rows)

    # --- VMEM budget: actual need with headroom, capped at 48 MiB for v7x ---
    dl = max(D, 128)
    vmem_need = (4 * tile_rows * dl * itemsize    # x + cond, double-buffered
                 + 2 * dl * dl * itemsize         # W (worst case double-buffered)
                 + 2 * 8 * dl * 4                 # bias
                 + 16 * dl * 4                    # accumulator scratch
                 + 2 * 16 * dl * 4)               # output partials
    vmem_limit = int(min(max(2 * vmem_need, 16 * 1024 * 1024), 48 * 1024 * 1024))

    cost = pl.CostEstimate(
        flops=2 * B * N * D * D + 10 * B * N * D,
        transcendentals=0,
        bytes_accessed=2 * B * N * D * itemsize + D * D * itemsize
                       + D * 4 + B * 16 * D * 4,
    )

    kernel = _make_kernel(tile_rows, D)

    grid_spec = pltpu.PrefetchScalarGridSpec(
        num_scalar_prefetch=2,                      # t, per-batch lengths -> SMEM
        grid=(B, inner),
        in_specs=[
            pl.BlockSpec((1, tile_rows, D), lambda bb, ii, t_r, l_r: (bb, ii, 0)),  # x
            pl.BlockSpec((1, tile_rows, D), lambda bb, ii, t_r, l_r: (bb, ii, 0)),  # cond
            pl.BlockSpec((D, D), lambda bb, ii, t_r, l_r: (0, 0)),                  # W (resident)
            pl.BlockSpec((1, D), lambda bb, ii, t_r, l_r: (0, 0)),                  # bias (resident)
        ],
        out_specs=pl.BlockSpec((1, 16, D), lambda bb, ii, t_r, l_r: (bb, 0, 0)),
        scratch_shapes=[pltpu.VMEM((16, D), jnp.float32)],
    )

    partials = pl.pallas_call(
        kernel,
        grid_spec=grid_spec,
        out_shape=jax.ShapeDtypeStruct((B, 16, D), jnp.float32),
        compiler_params=pltpu.CompilerParams(
            dimension_semantics=("parallel", "arbitrary"),
            vmem_limit_bytes=vmem_limit,
        ),
        cost_estimate=cost,
    )(t_arr, len_arr, x_s, cond_s, w_s, b2)

    sq_sum = jnp.sum(partials[:, 0:8, :])     # sum lm * diff^2
    ab_sum = jnp.sum(partials[:, 8:16, :])    # sum lm * |diff|
    return (0.5 * sq_sum + ab_sum) / denom


if __name__ == "__main__":
    B, N, D = 2, 16, 32

    key = jax.random.PRNGKey(0)
    kx, kc, kw = jax.random.split(key, 3)

    x = jax.random.normal(kx, (B, N, D), dtype=jnp.float32)
    cond = jax.random.normal(kc, (B, N, D), dtype=jnp.float32)

    # variable-length valid mask (lengths 16 and 12)
    lengths = jnp.array([16, 12], dtype=jnp.int32)

    # deterministic stand-in backbone parameters
    w = jax.random.normal(kw, (D, D), dtype=jnp.float32) * 0.05
    b = jnp.zeros((D,), dtype=jnp.float32)

    # deterministic replacement for randrange(0, min_seq_len - 1)
    min_seq_len = int(jnp.min(lengths))
    t = (min_seq_len - 1) // 2

    loss = regression_loss(x, cond, lengths, w, b, t)
    loss = jax.block_until_ready(loss)

    # pure-JAX f32 reference (same semantics as the PyTorch forward)
    pos = jnp.arange(N)[None, :]
    mask = pos < lengths[:, None]                              # (B, N)
    keep_ref = pos < t                                         # (1, N)
    masked_ref = x * keep_ref[..., None].astype(x.dtype) + cond
    out_full = jnp.einsum("bnd,de->bne", masked_ref, w) + b
    lm_ref = jnp.logical_and(jnp.logical_not(keep_ref), mask)  # (B, N)
    diff_ref = out_full - x
    sel = lm_ref[..., None]
    cnt = jnp.maximum(jnp.sum(lm_ref).astype(jnp.float32) * D, 1.0)
    ref_loss = (0.5 * jnp.sum(jnp.where(sel, diff_ref * diff_ref, 0.0))
                + jnp.sum(jnp.where(sel, jnp.abs(diff_ref), 0.0))) / cnt

    assert loss.shape == () and bool(jnp.isfinite(loss))
    # bf16 storage / bf16 MXU operands (f32 accumulation) -> slightly wider tol
    assert abs(float(loss) - float(ref_loss)) <= 3e-2 * max(1.0, abs(float(ref_loss)))
    print("KERNEL_OK")
</pallas_src>

<mosaic_0001>
module attributes {stable_mosaic.version = 11 : i64} {
  func.func @kernel(%arg0: i32, %arg1: i32, %arg2: memref<1xi32, #tpu.memory_space<smem>>, %arg3: memref<2xi32, #tpu.memory_space<smem>>, %arg4: memref<1x16x32xbf16, #tpu.memory_space<vmem>>, %arg5: memref<1x16x32xbf16, #tpu.memory_space<vmem>>, %arg6: memref<32x32xbf16, #tpu.memory_space<vmem>>, %arg7: memref<1x32xf32, #tpu.memory_space<vmem>>, %arg8: memref<1x16x32xf32, #tpu.memory_space<vmem>>, %arg9: memref<16x32xf32, #tpu.memory_space<vmem>>) attributes {dimension_semantics = [#tpu.dimension_semantics<parallel>, #tpu.dimension_semantics<arbitrary>], iteration_bounds = array<i64: 2, 1>, scalar_prefetch = 2 : i64, scratch_operands = 1 : i64, tpu.core_type = #tpu.core_type<tc>, window_params = [{transform_indices = @transform_0, window_bounds = array<i64: 1, 16, 32>}, {transform_indices = @transform_1, window_bounds = array<i64: 1, 16, 32>}, {pipeline_mode = #tpu.pipeline_mode<synchronous>, transform_indices = @transform_2, window_bounds = array<i64: 32, 32>}, {pipeline_mode = #tpu.pipeline_mode<synchronous>, transform_indices = @transform_3, window_bounds = array<i64: 1, 32>}, {transform_indices = @transform_4, window_bounds = array<i64: 1, 16, 32>}]} {
    %c0_i32 = arith.constant 0 : i32
    %0 = arith.cmpi eq, %arg1, %c0_i32 : i32
    %1 = arith.extui %0 : i1 to i32
    %c0_i32_0 = arith.constant 0 : i32
    %2 = arith.cmpi ne, %1, %c0_i32_0 : i32
    scf.if %2 {
      %cst_25 = arith.constant 0.000000e+00 : f32
      %56 = vector.broadcast %cst_25 : f32 to vector<16x32xf32>
      %c0_26 = arith.constant 0 : index
      %c0_27 = arith.constant 0 : index
      %57 = vector.load %arg9[%c0_26, %c0_27] : memref<16x32xf32, #tpu.memory_space<vmem>>, vector<16x32xf32>
      tpu.vector_store %arg9[%c0_26, %c0_27], %56 {strides = array<i32>} : memref<16x32xf32, #tpu.memory_space<vmem>>, vector<16x32xf32>,
    } else {
    }
    %c0 = arith.constant 0 : index
    %3 = memref.load %arg2[%c0] : memref<1xi32, #tpu.memory_space<smem>>
    %4 = arith.index_cast %arg0 : i32 to index
    %5 = memref.load %arg3[%4] : memref<2xi32, #tpu.memory_space<smem>>
    %c16_i32 = arith.constant 16 : i32
    %6 = arith.muli %arg1, %c16_i32 : i32
    %7 = tpu.iota {dimensions = array<i32: 0>} : vector<16x1xi32>
    %8 = vector.broadcast %6 : i32 to vector<16x1xi32>
    %9 = arith.addi %8, %7 : vector<16x1xi32>
    %10 = vector.broadcast %3 : i32 to vector<16x1xi32>
    %11 = arith.cmpi slt, %9, %10 : vector<16x1xi32>
    %12 = vector.broadcast %3 : i32 to vector<16x1xi32>
    %13 = arith.cmpi sge, %9, %12 : vector<16x1xi32>
    %14 = vector.broadcast %5 : i32 to vector<16x1xi32>
    %15 = arith.cmpi slt, %9, %14 : vector<16x1xi32>
    %16 = arith.andi %13, %15 : vector<16x1xi1>
    %c0_1 = arith.constant 0 : index
    %c0_2 = arith.constant 0 : index
    %c0_3 = arith.constant 0 : index
    %17 = vector.load %arg4[%c0_1, %c0_2, %c0_3] : memref<1x16x32xbf16, #tpu.memory_space<vmem>>, vector<1x16x32xbf16>
    %18 = vector.shape_cast %17 : vector<1x16x32xbf16> to vector<16x32xbf16>
    %c0_4 = arith.constant 0 : index
    %c0_5 = arith.constant 0 : index
    %c0_6 = arith.constant 0 : index
    %19 = vector.load %arg5[%c0_4, %c0_5, %c0_6] : memref<1x16x32xbf16, #tpu.memory_space<vmem>>, vector<1x16x32xbf16>
    %20 = vector.shape_cast %19 : vector<1x16x32xbf16> to vector<16x32xbf16>
    %cst = arith.constant 0.000000e+00 : bf16
    %21 = vector.shape_cast %11 : vector<16x1xi1> to vector<16x1xi1>
    %22 = vector.broadcast %21 : vector<16x1xi1> to vector<16x32xi1>
    %23 = vector.broadcast %cst : bf16 to vector<16x32xbf16>
    %24 = arith.select %22, %18, %23 : vector<16x32xi1>, vector<16x32xbf16>
    %25 = arith.addf %24, %20 : vector<16x32xbf16>
    %c0_7 = arith.constant 0 : index
    %c0_8 = arith.constant 0 : index
    %26 = vector.load %arg6[%c0_7, %c0_8] : memref<32x32xbf16, #tpu.memory_space<vmem>>, vector<32x32xbf16>
    %cst_9 = arith.constant dense<0.000000e+00> : vector<16x32xf32>
    %27 = tpu.matmul %25, %26, %cst_9 {dimension_numbers = #tpu.dot_dimension_numbers<[1], [0], [0], [1], [0, 0, 1, 1], [], []>} : vector<16x32xbf16>, vector<32x32xbf16>, vector<16x32xf32> -> vector<16x32xf32>
    %c0_10 = arith.constant 0 : index
    %c0_11 = arith.constant 0 : index
    %28 = vector.load %arg7[%c0_10, %c0_11] : memref<1x32xf32, #tpu.memory_space<vmem>>, vector<1x32xf32>
    %29 = vector.broadcast %28 : vector<1x32xf32> to vector<16x32xf32>
    %30 = arith.addf %27, %29 : vector<16x32xf32>
    %31 = arith.extf %18 : vector<16x32xbf16> to vector<16x32xf32>
    %32 = arith.subf %30, %31 : vector<16x32xf32>
    %33 = arith.mulf %32, %32 : vector<16x32xf32>
    %cst_12 = arith.constant 0.000000e+00 : f32
    %34 = vector.shape_cast %16 : vector<16x1xi1> to vector<16x1xi1>
    %35 = vector.broadcast %34 : vector<16x1xi1> to vector<16x32xi1>
    %36 = vector.broadcast %cst_12 : f32 to vector<16x32xf32>
    %37 = arith.select %35, %33, %36 : vector<16x32xi1>, vector<16x32xf32>
    %38 = math.absf %32 : vector<16x32xf32>
    %cst_13 = arith.constant 0.000000e+00 : f32
    %39 = vector.shape_cast %16 : vector<16x1xi1> to vector<16x1xi1>
    %40 = vector.broadcast %39 : vector<16x1xi1> to vector<16x32xi1>
    %41 = vector.broadcast %cst_13 : f32 to vector<16x32xf32>
    %42 = arith.select %40, %38, %41 : vector<16x32xi1>, vector<16x32xf32>
    %c0_14 = arith.constant 0 : index
    %c0_15 = arith.constant 0 : index
    %43 = vector.load %arg9[%c0_14, %c0_15] : memref<16x32xf32, #tpu.memory_space<vmem>>, vector<8x32xf32>
    %44 = vector.shape_cast %37 : vector<16x32xf32> to vector<2x8x32xf32>
    %cst_16 = arith.constant dense<0.000000e+00> : vector<8x32xf32>
    %45 = vector.multi_reduction <add>, %44, %cst_16 [0] : vector<2x8x32xf32> to vector<8x32xf32>
    %46 = arith.addf %43, %45 : vector<8x32xf32>
    %c0_17 = arith.constant 0 : index
    %c0_18 = arith.constant 0 : index
    %47 = vector.load %arg9[%c0_17, %c0_18] : memref<16x32xf32, #tpu.memory_space<vmem>>, vector<8x32xf32>
    tpu.vector_store %arg9[%c0_17, %c0_18], %46 {strides = array<i32>} : memref<16x32xf32, #tpu.memory_space<vmem>>, vector<8x32xf32>,
    %c8 = arith.constant 8 : index
    %c0_19 = arith.constant 0 : index
    %48 = vector.load %arg9[%c8, %c0_19] : memref<16x32xf32, #tpu.memory_space<vmem>>, vector<8x32xf32>
    %49 = vector.shape_cast %42 : vector<16x32xf32> to vector<2x8x32xf32>
    %cst_20 = arith.constant dense<0.000000e+00> : vector<8x32xf32>
    %50 = vector.multi_reduction <add>, %49, %cst_20 [0] : vector<2x8x32xf32> to vector<8x32xf32>
    %51 = arith.addf %48, %50 : vector<8x32xf32>
    %c8_21 = arith.constant 8 : index
    %c0_22 = arith.constant 0 : index
    %52 = vector.load %arg9[%c8_21, %c0_22] : memref<16x32xf32, #tpu.memory_space<vmem>>, vector<8x32xf32>
    tpu.vector_store %arg9[%c8_21, %c0_22], %51 {strides = array<i32>} : memref<16x32xf32, #tpu.memory_space<vmem>>, vector<8x32xf32>,
    %c0_i32_23 = arith.constant 0 : i32
    %53 = arith.cmpi eq, %arg1, %c0_i32_23 : i32
    %54 = arith.extui %53 : i1 to i32
    %c0_i32_24 = arith.constant 0 : i32
    %55 = arith.cmpi ne, %54, %c0_i32_24 : i32
    scf.if %55 {
      %c0_25 = arith.constant 0 : index
      %c0_26 = arith.constant 0 : index
      %56 = vector.load %arg9[%c0_25, %c0_26] : memref<16x32xf32, #tpu.memory_space<vmem>>, vector<16x32xf32>
      %57 = vector.shape_cast %56 : vector<16x32xf32> to vector<1x16x32xf32>
      %c0_27 = arith.constant 0 : index
      %c0_28 = arith.constant 0 : index
      %c0_29 = arith.constant 0 : index
      %58 = vector.load %arg8[%c0_27, %c0_28, %c0_29] : memref<1x16x32xf32, #tpu.memory_space<vmem>>, vector<1x16x32xf32>
      tpu.vector_store %arg8[%c0_27, %c0_28, %c0_29], %57 {strides = array<i32>} : memref<1x16x32xf32, #tpu.memory_space<vmem>>, vector<1x16x32xf32>,
    } else {
    }
    return
  }
  func.func @transform_0(%arg0: i32, %arg1: i32, %arg2: memref<1xi32, #tpu.memory_space<smem>>, %arg3: memref<2xi32, #tpu.memory_space<smem>>) -> (i32, i32, i32) {
    %c0_i32 = arith.constant 0 : i32
    %c0_i32_0 = arith.constant 0 : i32
    return %arg0, %arg1, %c0_i32 : i32, i32, i32
  }
  func.func @transform_1(%arg0: i32, %arg1: i32, %arg2: memref<1xi32, #tpu.memory_space<smem>>, %arg3: memref<2xi32, #tpu.memory_space<smem>>) -> (i32, i32, i32) {
    %c0_i32 = arith.constant 0 : i32
    %c0_i32_0 = arith.constant 0 : i32
    return %arg0, %arg1, %c0_i32 : i32, i32, i32
  }
  func.func @transform_2(%arg0: i32, %arg1: i32, %arg2: memref<1xi32, #tpu.memory_space<smem>>, %arg3: memref<2xi32, #tpu.memory_space<smem>>) -> (i32, i32) {
    %c0_i32 = arith.constant 0 : i32
    %c0_i32_0 = arith.constant 0 : i32
    %c0_i32_1 = arith.constant 0 : i32
    return %c0_i32, %c0_i32_0 : i32, i32
  }
  func.func @transform_3(%arg0: i32, %arg1: i32, %arg2: memref<1xi32, #tpu.memory_space<smem>>, %arg3: memref<2xi32, #tpu.memory_space<smem>>) -> (i32, i32) {
    %c0_i32 = arith.constant 0 : i32
    %c0_i32_0 = arith.constant 0 : i32
    %c0_i32_1 = arith.constant 0 : i32
    return %c0_i32, %c0_i32_0 : i32, i32
  }
  func.func @transform_4(%arg0: i32, %arg1: i32, %arg2: memref<1xi32, #tpu.memory_space<smem>>, %arg3: memref<2xi32, #tpu.memory_space<smem>>) -> (i32, i32, i32) {
    %c0_i32 = arith.constant 0 : i32
    %c0_i32_0 = arith.constant 0 : i32
    %c0_i32_1 = arith.constant 0 : i32
    return %arg0, %c0_i32, %c0_i32_0 : i32, i32, i32
  }
}

</mosaic_0001>

<llo_original>
// kernel: tpu_custom_call.1
$region0: #{tpu_custom_call.1}
  #allocation0 [shape = 'u32[]', space=smem, size = 0x4, offset = 0x4, fixed_abs, tag = 'smem constant byte address 0x4 - core index']
  #allocation1 [shape = 'u32[144,128]{1,0:T(1,128)}', space=vmem, size = 0x12000, scoped, tag = 'internal scratch']
  #allocation2 [shape = 'f32[16,32]{1,0:T(8,128)}', space=vmem, size = 0x2000, scoped, tag = 'scratch operand']
  #allocation3 [shape = 's32[1]{0}', space=sflag, size = 0x4, scoped, tag = 'scoped memory for tpu_custom_call.1']
  #allocation4 [shape = 's32[1]{0:T(128)S(6)}', space=smem, size = 0x200, scoped, tag = 'prefetched SMEM operand 0']
  #allocation5 [shape = 'u8[512]{0}', space=smem, size = 0x200, scoped, tag = 'prefetched SMEM operand 1']
  %s0 = inlined_call_operand.<no memory space> [shape: s32[1], index: 0, kind: input, shape index: {}]
  %s1 = inlined_call_operand.vmem [shape: s32[2], index: 1, kind: input, shape index: {}]
  %s2 = inlined_call_operand.hbm [shape: bf16[2,16,32], index: 2, kind: input, shape index: {}]
  %s3 = inlined_call_operand.hbm [shape: bf16[2,16,32], index: 3, kind: input, shape index: {}]
  %s4 = inlined_call_operand.hbm [shape: bf16[32,32], index: 4, kind: input, shape index: {}]
  %s5 = inlined_call_operand.vmem [shape: f32[1,32], index: 5, kind: input, shape index: {}]
  %s6 = inlined_call_operand.hbm [shape: f32[2,16,32], index: 6, kind: output, shape index: {}]
  %s7 = sld [smem:[#allocation0]]
  $region69: #{tpu_custom_call.1} parent=0
    _
  %s9 = ssub.s32 1, %s7
  %s10 = scalar_select 0, %s9, %s7
  %11 = sst [smem:[#allocation4]] %s0
  %s12 = sshll.u32 %s1, 4
  %s13 = int_to_ptr.vmem [resolvable:$true] %s12
  %15 = dma.vmem_to_smem %s13, 16, [#allocation5], [#allocation3]
  %16 = dma.done [#allocation3], 16
  %17 = sfence
  $region1: #{tpu_custom_call.1} parent=0
    #allocation6 [shape = 'u8[8192]{0}', space=vmem, size = 0x2000, scoped, tag = 'input window, operand 2']
    #allocation7 [shape = 's32[2]{0}', space=sflag, size = 0x8, scoped, tag = 'scoped memory for tpu_custom_call.1']
    #allocation8 [shape = 's32[2]{0}', space=sflag, size = 0x8, scoped, tag = 'scoped memory for tpu_custom_call.1']
    #allocation9 [shape = 'u8[8192]{0}', space=vmem, size = 0x2000, scoped, tag = 'input window, operand 3']
    #allocation10 [shape = 's32[2]{0}', space=sflag, size = 0x8, scoped, tag = 'scoped memory for tpu_custom_call.1']
    #allocation11 [shape = 'u8[8192]{0}', space=vmem, size = 0x2000, scoped, tag = 'input window, operand 4, single buffered']
    #allocation12 [shape = 'u8[16384]{0}', space=vmem, size = 0x4000, scoped, tag = 'output window, operand 0']
    %18 = vsyncpa [#allocation7], 0
    %s19 = scalar_lea.sflag [#allocation7], 1
    %20 = vsyncpa %s19, 0
    %21 = vsyncpa [#allocation10], 0
    %s22 = scalar_lea.sflag [#allocation10], 1
    %23 = vsyncpa %s22, 0
    %24 = vsyncpa [#allocation8], 0
    %s25 = scalar_lea.sflag [#allocation8], 1
    %26 = vsyncpa %s25, 0
    loop: start=0, step=1, limit=4
    $region2: #{tpu_custom_call.1} parent=1 // loop_pre_header
      _
    $region3: #{tpu_custom_call.1} parent=1 // loop_header
      %s28 = sphi 0, %s32
      %p29 = scmp.ge.s32.totalorder %s28, 4
      %s35 = sphi 0, %s47
      %s36 = sphi 0, %s43
      %s37 = sphi 0, %s35
      %s38 = sphi 0, %s36
      %s39 = sphi 0, %s37
      %s40 = sphi 0, %s38
      %s52 = sphi 0, %s54
      %s55 = sphi 0, %s52
      %s56 = sphi 0, %s55
      %s72 = sphi 0, %s56
      %s80 = sphi 0, %s82
      %s83 = sphi 0, %s80
      %s84 = sphi 0, %s83
      %s100 = sphi 0, %s84
      %s104 = sphi 0, %s104
      %s106 = sphi 0, %s104
      %s107 = sphi 0, %s106
      %s121 = sphi 0, %s107
      %s125 = sphi 0, %s125
      %s127 = sphi 0, %s125
      %s128 = sphi 0, %s127
      %s142 = sphi 0, %s128
      %s148 = sphi 0, %s150
      %s151 = sphi 0, %s148
      %s152 = sphi 0, %s151
      %s168 = sphi 0, %s152
    $region4: #{tpu_custom_call.1} parent=1 // loop_header_branch
      %31 = sbr.rel (%p29) target = $region8
    $region5: #{tpu_custom_call.1} parent=1 // loop_body
      %s33 = ssub.s32 %s28, 1
      %s34 = ssub.s32 %s28, 2
      %s41 = sadd.s32 1, %s36
      %p42 = scmp.ge.s32.totalorder %s41, 1
      %s43 = scalar_select %p42, 0, %s41
      %s44 = sadd.s32 1, %s35
      %s45 = scalar_select %p42, %s44, %s35
      %p46 = scmp.ge.s32.totalorder %s45, 2
      %s47 = scalar_select %p46, 0, %s45
      %s48 = ssub.s32 %s35, %s47
      %s49 = ssub.s32 %s36, %s43
      %s50 = sor.u32 %s48, %s49
      %p51 = scmp.eq.s32.totalorder %s50, 0
      %s53 = sadd.s32 %s52, 1
      %s54 = scalar_select %p51, %s52, %s53
      %p57 = pneg %p51
      %p58 = scmp.eq.s32.totalorder %s28, 1
      %p59 = por %p57, %p58
      %p60 = scmp.ne.s32.totalorder %s52, %s55
      %p61 = scmp.eq.s32.totalorder %s28, 0
      %p62 = por %p60, %p61
      %p63 = scmp.ne.s32.totalorder %s52, %s55
      %p64 = scmp.eq.s32.totalorder %s33, 1
      %p65 = por %p63, %p64
      %p66 = scmp.ne.s32.totalorder %s55, %s56
      %p67 = scmp.eq.s32.totalorder %s33, 0
      %p68 = por %p66, %p67
      %p69 = scmp.ne.s32.totalorder %s55, %s56
      %p70 = scmp.eq.s32.totalorder %s34, 1
      %p71 = por %p69, %p70
      %p73 = scmp.ne.s32.totalorder %s56, %s72
      %p74 = scmp.eq.s32.totalorder %s34, 0
      %p75 = por %p73, %p74
      %s76 = ssub.s32 %s35, %s47
      %s77 = ssub.s32 %s36, %s43
      %s78 = sor.u32 %s76, %s77
      %p79 = scmp.eq.s32.totalorder %s78, 0
      %s81 = sadd.s32 %s80, 1
      %s82 = scalar_select %p79, %s80, %s81
      %p85 = pneg %p79
      %p86 = scmp.eq.s32.totalorder %s28, 1
      %p87 = por %p85, %p86
      %p88 = scmp.ne.s32.totalorder %s80, %s83
      %p89 = scmp.eq.s32.totalorder %s28, 0
      %p90 = por %p88, %p89
      %p91 = scmp.ne.s32.totalorder %s80, %s83
      %p92 = scmp.eq.s32.totalorder %s33, 1
      %p93 = por %p91, %p92
      %p94 = scmp.ne.s32.totalorder %s83, %s84
      %p95 = scmp.eq.s32.totalorder %s33, 0
      %p96 = por %p94, %p95
      %p97 = scmp.ne.s32.totalorder %s83, %s84
      %p98 = scmp.eq.s32.totalorder %s34, 1
      %p99 = por %p97, %p98
      %p101 = scmp.ne.s32.totalorder %s84, %s100
      %p102 = scmp.eq.s32.totalorder %s34, 0
      %p103 = por %p101, %p102
      %s105 = sadd.s32 %s104, 1
      %p108 = scmp.eq.s32.totalorder %s28, 1
      %p109 = scmp.ne.s32.totalorder %s104, %s106
      %p110 = scmp.eq.s32.totalorder %s28, 0
      %p111 = por %p109, %p110
      %p112 = scmp.ne.s32.totalorder %s104, %s106
      %p113 = scmp.eq.s32.totalorder %s33, 1
      %p114 = por %p112, %p113
      %p115 = scmp.ne.s32.totalorder %s106, %s107
      %p116 = scmp.eq.s32.totalorder %s33, 0
      %p117 = por %p115, %p116
      %p118 = scmp.ne.s32.totalorder %s106, %s107
      %p119 = scmp.eq.s32.totalorder %s34, 1
      %p120 = por %p118, %p119
      %p122 = scmp.ne.s32.totalorder %s107, %s121
      %p123 = scmp.eq.s32.totalorder %s34, 0
      %p124 = por %p122, %p123
      %s126 = sadd.s32 %s125, 1
      %p129 = scmp.eq.s32.totalorder %s28, 1
      %p130 = scmp.ne.s32.totalorder %s125, %s127
      %p131 = scmp.eq.s32.totalorder %s28, 0
      %p132 = por %p130, %p131
      %p133 = scmp.ne.s32.totalorder %s125, %s127
      %p134 = scmp.eq.s32.totalorder %s33, 1
      %p135 = por %p133, %p134
      %p136 = scmp.ne.s32.totalorder %s127, %s128
      %p137 = scmp.eq.s32.totalorder %s33, 0
      %p138 = por %p136, %p137
      %p139 = scmp.ne.s32.totalorder %s127, %s128
      %p140 = scmp.eq.s32.totalorder %s34, 1
      %p141 = por %p139, %p140
      %p143 = scmp.ne.s32.totalorder %s128, %s142
      %p144 = scmp.eq.s32.totalorder %s34, 0
      %p145 = por %p143, %p144
      %s146 = ssub.s32 %s35, %s47
      %p147 = scmp.eq.s32.totalorder %s146, 0
      %s149 = sadd.s32 %s148, 1
      %s150 = scalar_select %p147, %s148, %s149
      %p153 = pneg %p147
      %p154 = scmp.eq.s32.totalorder %s28, 1
      %p155 = por %p153, %p154
      %p156 = scmp.ne.s32.totalorder %s148, %s151
      %p157 = scmp.eq.s32.totalorder %s28, 0
      %p158 = por %p156, %p157
      %p159 = scmp.ne.s32.totalorder %s148, %s151
      %p160 = scmp.eq.s32.totalorder %s33, 1
      %p161 = por %p159, %p160
      %p162 = scmp.ne.s32.totalorder %s151, %s152
      %p163 = scmp.eq.s32.totalorder %s33, 0
      %p164 = por %p162, %p163
      %p165 = scmp.ne.s32.totalorder %s151, %s152
      %p166 = scmp.eq.s32.totalorder %s34, 1
      %p167 = por %p165, %p166
      %p169 = scmp.ne.s32.totalorder %s152, %s168
      %p170 = scmp.eq.s32.totalorder %s34, 0
      %p171 = por %p169, %p170
      %p172 = scmp.le.s32.totalorder 1, %s28
      %p173 = scmp.lt.s32.totalorder %s28, 3
      %p174 = pnand %p172, %p173
      %p175 = pneg %p174
      // Predicated region
      $region9: #{tpu_custom_call.1} parent=5 // pred_check
        _
      $region10: #{tpu_custom_call.1} parent=5 // pred_check_branch
        %177 = sbr.rel (%p174) target = $region12
      $region11: #{tpu_custom_call.1} parent=5 // pred_region
        %s178 = ssub.s32 %s28, 1
        // Predicated region
        $region13: #{tpu_custom_call.1} parent=11 // pred_check
          %p179 = pneg %p117
        $region14: #{tpu_custom_call.1} parent=11 // pred_check_branch
          %181 = sbr.rel (%p179) target = $region16
        $region15: #{tpu_custom_call.1} parent=11 // pred_region
          %s183 = ssub.s32 256, 256
          %184 = vsyncadd [#allocation10], %s183
          %s185 = sshll.u32 [#allocation11], 4
          %s186 = int_to_ptr.vmem [resolvable:$true] %s185
          %191 = dma.hbm_to_vmem [thread:$0]  %s4, 256, %s186, [#allocation10], 64, 64, 4
        $region16: #{tpu_custom_call.1} parent=11 // pred_fallthru
          _
        // Predicated region
        $region17: #{tpu_custom_call.1} parent=11 // pred_check
          %p192 = pneg %p138
        $region18: #{tpu_custom_call.1} parent=11 // pred_check_branch
          %194 = sbr.rel (%p192) target = $region20
        $region19: #{tpu_custom_call.1} parent=11 // pred_region
          _
        $region20: #{tpu_custom_call.1} parent=11 // pred_fallthru
          _
      $region12: #{tpu_custom_call.1} parent=5 // pred_fallthru
        _
      %p195 = scmp.lt.s32.totalorder %s28, 2
      // Predicated region
      $region21: #{tpu_custom_call.1} parent=5 // pred_check
        %p196 = pneg %p195
      $region22: #{tpu_custom_call.1} parent=5 // pred_check_branch
        %198 = sbr.rel (%p196) target = $region24
      $region23: #{tpu_custom_call.1} parent=5 // pred_region
        // Predicated region
        $region25: #{tpu_custom_call.1} parent=23 // pred_check
          %p199 = pneg %p62
        $region26: #{tpu_custom_call.1} parent=23 // pred_check_branch
          %201 = sbr.rel (%p199) target = $region28
        $region27: #{tpu_custom_call.1} parent=23 // pred_region
          %s202 = sand.u32 %s52, 1
          %s203 = scalar_lea.sflag [#allocation7], %s202
          %s204 = sand.u32 %s52, 1
          %s205 = smul.addr %s204, 8
          %s206 = scalar_lea.vmem [#allocation6], %s205
          %s207 = smul.u32 2, %s36
          %s209 = ssub.s32 128, 128
          %210 = vsyncadd %s203, %s209
          %s211 = smul.addr %s35, 2
          %s212 = sadd.s32 %s207, %s211
          %s213 = smul.addr %s212, 64
          %s214 = scalar_lea.hbm %s2, %s213
          %s215 = sshll.u32 %s206, 4
          %s216 = int_to_ptr.vmem [resolvable:$true] %s215
          %221 = dma.hbm_to_vmem [thread:$0]  %s214, 128, %s216, %s203, 64, 64, 4
        $region28: #{tpu_custom_call.1} parent=23 // pred_fallthru
          _
        // Predicated region
        $region29: #{tpu_custom_call.1} parent=23 // pred_check
          %p222 = pneg %p90
        $region30: #{tpu_custom_call.1} parent=23 // pred_check_branch
          %224 = sbr.rel (%p222) target = $region32
        $region31: #{tpu_custom_call.1} parent=23 // pred_region
          %s225 = sand.u32 %s28, 1
          %s226 = scalar_lea.sflag [#allocation10], %s225
          %s227 = sand.u32 %s80, 1
          %s228 = smul.addr %s227, 8
          %s229 = scalar_lea.vmem [#allocation9], %s228
          %s230 = smul.u32 2, %s36
          %s232 = ssub.s32 128, 128
          %233 = vsyncadd %s226, %s232
          %s234 = smul.addr %s35, 2
          %s235 = sadd.s32 %s230, %s234
          %s236 = smul.addr %s235, 64
          %s237 = scalar_lea.hbm %s3, %s236
          %s238 = sshll.u32 %s229, 4
          %s239 = int_to_ptr.vmem [resolvable:$true] %s238
          %244 = dma.hbm_to_vmem [thread:$0]  %s237, 128, %s239, %s226, 64, 64, 4
        $region32: #{tpu_custom_call.1} parent=23 // pred_fallthru
          _
      $region24: #{tpu_custom_call.1} parent=5 // pred_fallthru
        _
      %p245 = scmp.le.s32.totalorder 1, %s28
      %p246 = scmp.lt.s32.totalorder %s28, 3
      %p247 = pnand %p245, %p246
      %p248 = pneg %p247
      // Predicated region
      $region33: #{tpu_custom_call.1} parent=5 // pred_check
        _
      $region34: #{tpu_custom_call.1} parent=5 // pred_check_branch
        %250 = sbr.rel (%p247) target = $region36
      $region35: #{tpu_custom_call.1} parent=5 // pred_region
        %s251 = ssub.s32 %s28, 1
        %s252 = sand.u32 %s55, 1
        %s253 = scalar_lea.sflag [#allocation7], %s252
        %s254 = sand.u32 %s55, 1
        %s255 = smul.addr %s254, 8
        %s256 = scalar_lea.vmem [#allocation6], %s255
        // Predicated region
        $region37: #{tpu_custom_call.1} parent=35 // pred_check
          %p257 = pneg %p68
        $region38: #{tpu_custom_call.1} parent=35 // pred_check_branch
          %259 = sbr.rel (%p257) target = $region40
        $region39: #{tpu_custom_call.1} parent=35 // pred_region
          %260 = dma.done %s253, 128
        $region40: #{tpu_custom_call.1} parent=35 // pred_fallthru
          _
        %s261 = sand.u32 %s33, 1
        %s262 = scalar_lea.sflag [#allocation10], %s261
        %s263 = sand.u32 %s83, 1
        %s264 = smul.addr %s263, 8
        %s265 = scalar_lea.vmem [#allocation9], %s264
        // Predicated region
        $region41: #{tpu_custom_call.1} parent=35 // pred_check
          %p266 = pneg %p96
        $region42: #{tpu_custom_call.1} parent=35 // pred_check_branch
          %268 = sbr.rel (%p266) target = $region44
        $region43: #{tpu_custom_call.1} parent=35 // pred_region
          %269 = dma.done %s262, 128
        $region44: #{tpu_custom_call.1} parent=35 // pred_fallthru
          _
        // Predicated region
        $region45: #{tpu_custom_call.1} parent=35 // pred_check
          %p270 = pneg %p117
        $region46: #{tpu_custom_call.1} parent=35 // pred_check_branch
          %272 = sbr.rel (%p270) target = $region48
        $region47: #{tpu_custom_call.1} parent=35 // pred_region
          %273 = dma.done [#allocation10], 256
        $region48: #{tpu_custom_call.1} parent=35 // pred_fallthru
          _
        %s274 = sand.u32 %s55, 1
        %s275 = scalar_lea.sflag [#allocation7], %s274
        %s276 = sand.u32 %s55, 1
        %s277 = smul.addr %s276, 8
        %s278 = scalar_lea.vmem [#allocation6], %s277
        %p279 = pneg %p68
        %p280 = pneg %p65
        %s281 = sand.u32 %s33, 1
        %s282 = scalar_lea.sflag [#allocation10], %s281
        %s283 = sand.u32 %s83, 1
        %s284 = smul.addr %s283, 8
        %s285 = scalar_lea.vmem [#allocation9], %s284
        %p286 = pneg %p96
        %p287 = pneg %p93
        %p288 = pneg %p117
        %p289 = pneg %p114
        %p290 = pneg %p138
        %p291 = pneg %p135
        %p292 = pneg %p164
        %p293 = pneg %p161
        %s294 = sand.u32 %s151, 1
        %s295 = scalar_lea.sflag [#allocation8], %s294
        %s296 = sand.u32 %s151, 1
        %s297 = smul.addr %s296, 16
        %s298 = scalar_lea.vmem [#allocation12], %s297
        %s299 = smul.u32 2, %s38
        %s300 = smul.u32 2, %s38
        %p302 = scmp.eq.s32.totalorder %s38, 0
        // Predicated region
        $region49: #{tpu_custom_call.1} parent=35 // pred_check
          %p303 = pneg %p302
        $region50: #{tpu_custom_call.1} parent=35 // pred_check_branch
          %305 = sbr.rel (%p303) target = $region52
        $region51: #{tpu_custom_call.1} parent=35 // pred_region
          %vm306 = vcmask 261120
          %307 = vst.msk [vmem:[#allocation2] sm:$0xff] %vm306, 0.0
          %308 = vst.msk [vmem:[#allocation2 + $0x8] sm:$0xff] %vm306, 0.0
        $region52: #{tpu_custom_call.1} parent=35 // pred_fallthru
          _
        %s309 = sld [smem:[#allocation4]]
        %s310 = sld [smem:[#allocation5 + %s37]]
        %s311 = smul.u32 %s38, 16
        %v312 = vlaneseq
        %v313 = vshrl.u32 %v312, 7
        %v314 = vadd.s32 %v313, 8
        %v315 = vstv %s311
        %v316 = vadd.s32 %v315, %v313
        %v317 = vadd.s32 %v315, %v314
        %v318 = vstv %s309
        %vm319 = vcmp.lt.s32.totalorder %v316, %v318
        %vm320 = vcmp.lt.s32.totalorder %v317, %v318
        %vm321 = vcmp.ge.s32.totalorder %v316, %v318
        %vm322 = vcmp.ge.s32.totalorder %v317, %v318
        %v323 = vstv %s310
        %vm324 = vcmp.lt.s32.totalorder %v316, %v323
        %vm325 = vcmp.lt.s32.totalorder %v317, %v323
        %vm326 = vmand %vm321, %vm324
        %vm327 = vmand %vm322, %vm325
        %v328 = vld [vmem:[%s256] sm:$0xf]
        %v329 = vld [vmem:[%s256 + $0x4] sm:$0xf]
        %v330 = vld [vmem:[%s265] sm:$0xf]
        %v331 = vld [vmem:[%s265 + $0x4] sm:$0xf]
        %v332 = vsel %vm319, 1, 0
        %v333 = vsel %vm320, 1, 0
        %vm334 = vcmp.eq.s32.totalorder %v332, 1
        %vm335 = vcmp.eq.s32.totalorder %v333, 1
        %vm336 = vmpackc.low %vm334, %vm334
        %vm337 = vmpackc.low %vm335, %vm335
        %v338 = vsel %vm336, %v328, 0
        %v339 = vsel %vm337, %v329, 0
        %v340 = vadd.bf16 %v338, %v330
        %v341 = vadd.bf16 %v339, %v331
        %v342 = vld [vmem:[#allocation11] sm:$0xf]
        %v343 = vld [vmem:[#allocation11 + $0x4] sm:$0xf]
        %v344 = vld [vmem:[#allocation11 + $0x8] sm:$0xf]
        %v345 = vld [vmem:[#allocation11 + $0xc] sm:$0xf]
        %v346 = vld [vmem:[%s5] sm:$0x1]
        %v348 = vlaneseq
        %v349 = vshrl.u32 %v348, 7
        %v350 = vsub.s32 0, %v349
        %v351 = vrot.slane %v346, %v350
        %v355 = vunpack.c.l.b16 %v340
        %v356 = vunpack.c.l.b16 %v341
        %v357 = vpack.c.b16 %v356, %v355
        %v362 = vunpack.c.l.b16 %v342
        %v363 = vunpack.c.l.b16 %v343
        %v364 = vunpack.c.l.b16 %v344
        %v365 = vunpack.c.l.b16 %v345
        %v366 = vpack.c.b16 %v363, %v362
        %v367 = vpack.c.b16 %v365, %v364
        %vm370 = vcmask 261120
        %v372 = vsel %vm370, %v357, 0
        %374 = vmatprep.subr.bf16.mxu0 0
        %375 = vmatpush1.bf16.msra.mxu0 0
        %376 = vmatprep.subr.bf16.mxu0 0
        %377 = vmatpush1.bf16.msra.mxu0 0
        %378 = vmatprep.subr.bf16.mxu0 0
        %379 = vmatpush1.bf16.msra.mxu0 0
        %380 = vmatprep.subr.bf16.mxu0 0
        %381 = vmatpush1.bf16.msra.mxu0 0
        %382 = vmatprep.subr.bf16.mxu0 0
        %383 = vmatpush1.bf16.msra.mxu0 0
        %384 = vmatprep.subr.bf16.mxu0 0
        %385 = vmatpush1.bf16.msra.mxu0 0
        %386 = vmatprep.subr.bf16.mxu0 0
        %387 = vmatpush1.bf16.msra.mxu0 %v367
        %388 = vmatprep.subr.bf16.mxu0 0
        %389 = vmatpush1.bf16.msra.mxu0 %v366
        %390 = vmatprep.subr.bf16.mxu0 0
        %391 = vmatpush2.bf16.msra.mxu0 0
        %392 = vmatprep.subr.bf16.mxu0 0
        %393 = vmatpush2.bf16.msra.mxu0 0
        %394 = vmatprep.subr.bf16.mxu0 0
        %395 = vmatpush2.bf16.msra.mxu0 0
        %396 = vmatprep.subr.bf16.mxu0 0
        %397 = vmatpush2.bf16.msra.mxu0 0
        %398 = vmatprep.subr.bf16.mxu0 0
        %399 = vmatpush2.bf16.msra.mxu0 0
        %400 = vmatprep.subr.bf16.mxu0 0
        %401 = vmatpush2.bf16.msra.mxu0 0
        %402 = vmatprep.subr.bf16.mxu0 0
        %403 = vmatpush2.bf16.msra.mxu0 0
        %404 = vmatprep.subr.bf16.mxu0 0
        %405 = vmatpush2.bf16.msra.mxu0 0
        %406 = vmatprep.mubr.bf16.mxu0 0
        %407 = vmatmul.mubr.bf16.gmra.mxu0 %v372
        %v408 = vpop.f32.mrf.mxu0
        %v409 = vadd.f32 %v351, %v408
        %v410 = vpop.f32.mrf.mxu0
        %v411 = vpop.f32.mrf.mxu0
        %v412 = vadd.f32 %v351, %v411
        %v413 = vpop.f32.mrf.mxu0
        %414 = vdwg.mxu0
        %v415 = vunpack.c.l.bf16 %v328
        %v416 = vunpack.c.l.bf16 %v329
        %v417 = vsub.f32 %v409, %v415
        %v418 = vsub.f32 %v412, %v416
        %v419 = vmul.f32 %v417, %v417
        %v420 = vmul.f32 %v418, %v418
        %v421 = vsel %vm326, 1, 0
        %v422 = vsel %vm327, 1, 0
        %vm423 = vcmp.eq.s32.totalorder %v421, 1
        %vm424 = vcmp.eq.s32.totalorder %v422, 1
        %v425 = vsel %vm423, %v419, 0.0
        %v426 = vsel %vm424, %v420, 0.0
        %v427 = vand.u32 2147483647, %v417
        %v428 = vand.u32 2147483647, %v418
        %v429 = vsel %vm423, %v427, 0.0
        %v430 = vsel %vm424, %v428, 0.0
        %v431 = vld [vmem:[#allocation2] sm:$0xff]
        %v432 = vsel %vm370, %v425, 0.0
        %v433 = vsel %vm370, %v426, 0.0
        %v434 = vadd.f32 %v432, %v433
        %v435 = vadd.f32 %v431, %v434
        %436 = vst.msk [vmem:[#allocation2] sm:$0xff] %vm370, %v435
        %v437 = vld [vmem:[#allocation2 + $0x8] sm:$0xff]
        %v438 = vsel %vm370, %v429, 0.0
        %v439 = vsel %vm370, %v430, 0.0
        %v440 = vadd.f32 %v438, %v439
        %v441 = vadd.f32 %v437, %v440
        %442 = vst.msk [vmem:[#allocation2 + $0x8] sm:$0xff] %vm370, %v441
        // Predicated region
        $region53: #{tpu_custom_call.1} parent=35 // pred_check
          %p443 = pneg %p302
        $region54: #{tpu_custom_call.1} parent=35 // pred_check_branch
          %445 = sbr.rel (%p443) target = $region56
        $region55: #{tpu_custom_call.1} parent=35 // pred_region
          %v446 = vld [vmem:[#allocation2] sm:$0xff]
          %v447 = vld [vmem:[#allocation2 + $0x8] sm:$0xff]
          %448 = vst.msk [vmem:[%s298] sm:$0xff] %vm370, %v446
          %449 = vst.msk [vmem:[%s298 + $0x8] sm:$0xff] %vm370, %v447
        $region56: #{tpu_custom_call.1} parent=35 // pred_fallthru
          _
        %s450 = sand.u32 %s151, 1
        %s451 = scalar_lea.sflag [#allocation8], %s450
        %s452 = sand.u32 %s151, 1
        %s453 = smul.addr %s452, 16
        %s454 = scalar_lea.vmem [#allocation12], %s453
        // Predicated region
        $region57: #{tpu_custom_call.1} parent=35 // pred_check
          %p455 = pneg %p161
        $region58: #{tpu_custom_call.1} parent=35 // pred_check_branch
          %457 = sbr.rel (%p455) target = $region60
        $region59: #{tpu_custom_call.1} parent=35 // pred_region
          %s459 = ssub.s32 256, 256
          %460 = vsyncadd %s451, %s459
          %s461 = smul.addr %s37, 2
          %s462 = smul.addr %s461, 128
          %s463 = scalar_lea.hbm %s6, %s462
          %s464 = sshll.u32 %s454, 4
          %s465 = int_to_ptr.vmem [resolvable:$true] %s464
          %470 = dma.vmem_to_hbm [thread:$0]  %s465, 256, %s463, %s451, 128, 128, 8
        $region60: #{tpu_custom_call.1} parent=35 // pred_fallthru
          _
      $region36: #{tpu_custom_call.1} parent=5 // pred_fallthru
        _
      %p471 = scmp.le.s32.totalorder 2, %s28
      // Predicated region
      $region61: #{tpu_custom_call.1} parent=5 // pred_check
        %p472 = pneg %p471
      $region62: #{tpu_custom_call.1} parent=5 // pred_check_branch
        %474 = sbr.rel (%p472) target = $region64
      $region63: #{tpu_custom_call.1} parent=5 // pred_region
        %s475 = ssub.s32 %s28, 2
        // Predicated region
        $region65: #{tpu_custom_call.1} parent=63 // pred_check
          %p476 = pneg %p167
        $region66: #{tpu_custom_call.1} parent=63 // pred_check_branch
          %478 = sbr.rel (%p476) target = $region68
        $region67: #{tpu_custom_call.1} parent=63 // pred_region
          %s479 = sand.u32 %s152, 1
          %s480 = scalar_lea.sflag [#allocation8], %s479
          %s481 = sand.u32 %s152, 1
          %s482 = smul.addr %s481, 16
          %s483 = scalar_lea.vmem [#allocation12], %s482
          %484 = dma.done %s480, 256
        $region68: #{tpu_custom_call.1} parent=63 // pred_fallthru
          _
      $region64: #{tpu_custom_call.1} parent=5 // pred_fallthru
        _
    $region6: #{tpu_custom_call.1} parent=1 // loop_footer
      %s32 = sadd.s32 1, %s28
    $region7: #{tpu_custom_call.1} parent=1 // loop_footer_branch
      %27 = sbr.rel target = $region3
    $region8: #{tpu_custom_call.1} parent=1 // loop_exit
      _
    %485 = vsyncpa [#allocation7], 1
    %s486 = scalar_lea.sflag [#allocation7], 1
    %487 = vsyncpa %s486, 1
    %488 = vsyncpa [#allocation10], 1
    %s489 = scalar_lea.sflag [#allocation10], 1
    %490 = vsyncpa %s489, 1
    %491 = vsyncpa [#allocation8], 1
    %s492 = scalar_lea.sflag [#allocation8], 1
    %493 = vsyncpa %s492, 1

</llo_original>
